<compile_context>
chip_gen: v7x
topology: tpu7x:2x2x1
jax: 0.10.0
libtpu: 0.0.40
codegen_flags: <defaults>
</compile_context>

<pallas_src>
import functools

import jax
import jax.numpy as jnp
from jax import lax
from jax.experimental import pallas as pl
from jax.experimental.pallas import tpu as pltpu


# ---------------------------------------------------------------------------
# Shared MLP tail:  x (b, 2D) bf16 -> relu(fc1) -> relu(fc2) -> sigmoid(fc3)*4+1
# ---------------------------------------------------------------------------
def _mlp_tail(x, w1_ref, b1_ref, w2_ref, b2_ref, w3_ref, b3_ref, out_ref):
    # fc1: single K = 2*D matmul (bf16 operands, f32 accumulation)
    h1 = jnp.dot(x, w1_ref[...], preferred_element_type=jnp.float32) + b1_ref[...]
    h1 = jnp.maximum(h1, 0.0).astype(jnp.bfloat16)                     # (b, 64)
    h2 = jnp.dot(h1, w2_ref[...], preferred_element_type=jnp.float32) + b2_ref[...]
    h2 = jnp.maximum(h2, 0.0)                                          # (b, 32) f32
    # fc3 (32 -> 1) on the VPU/XLU: broadcast row-mul + lane reduce.
    logits = jnp.sum(h2 * w3_ref[...], axis=-1, keepdims=True) + b3_ref[...]
    out_ref[...] = jax.nn.sigmoid(logits) * 4.0 + 1.0


# ---------------------------------------------------------------------------
# Fast path: whole (block-diagonal) table resident in VMEM, one-hot MXU gather.
#   tab_ref is [[user_emb, 0], [0, item_emb]]  -> oh @ tab == [u_row | i_row]
# ---------------------------------------------------------------------------
def _net_kernel_fast(num_users, u_ref, i_ref, tab_ref,
                     w1_ref, b1_ref, w2_ref, b2_ref, w3_ref, b3_ref, out_ref):
    b = u_ref.shape[0]
    rows = tab_ref.shape[0]
    col = lax.broadcasted_iota(jnp.int32, (b, rows), 1)
    hit = jnp.logical_or(col == u_ref[...], col == (i_ref[...] + num_users))
    one_hot = hit.astype(jnp.bfloat16)                                 # (b, NU+NI)
    # Exact row selection: products are 1.0 * bf16, f32 accumulation -> exact.
    x = jnp.dot(one_hot, tab_ref[...], preferred_element_type=jnp.float32)
    x = x.astype(jnp.bfloat16)                                         # (b, 2*D)
    _mlp_tail(x, w1_ref, b1_ref, w2_ref, b2_ref, w3_ref, b3_ref, out_ref)


# ---------------------------------------------------------------------------
# Fallback path: tables stay in HBM (pl.ANY); per-row async-DMA gather of only
# the needed bf16 rows into one merged (b_tile, 2*D) buffer (user rows land in
# lanes [0:D], item rows in lanes [D:2D] -> concat is free).
# ---------------------------------------------------------------------------
def _net_kernel_dma(u_idx_ref, i_idx_ref,            # SMEM scalar prefetch (B_pad,)
                    utab_ref, itab_ref,               # HBM bf16 tables
                    w1_ref, b1_ref, w2_ref, b2_ref, w3_ref, b3_ref,
                    out_ref,
                    x_buf, sem):                      # VMEM (b_tile, 2D) bf16, 2 DMA sems
    b, two_d = x_buf.shape
    d = two_d // 2
    base = pl.program_id(0) * b

    # Issue all row gathers (padded tail rows fetch row 0 -> harmless, sliced off).
    def issue(r, c):
        u = u_idx_ref[base + r]
        i = i_idx_ref[base + r]
        pltpu.make_async_copy(utab_ref.at[pl.ds(u, 1), :],
                              x_buf.at[pl.ds(r, 1), pl.ds(0, d)], sem.at[0]).start()
        pltpu.make_async_copy(itab_ref.at[pl.ds(i, 1), :],
                              x_buf.at[pl.ds(r, 1), pl.ds(d, d)], sem.at[1]).start()
        return c
    lax.fori_loop(0, b, issue, 0, unroll=8)

    # Drain: each wait consumes one same-sized copy completion per semaphore.
    def drain(r, c):
        pltpu.make_async_copy(utab_ref.at[pl.ds(0, 1), :],
                              x_buf.at[pl.ds(r, 1), pl.ds(0, d)], sem.at[0]).wait()
        pltpu.make_async_copy(itab_ref.at[pl.ds(0, 1), :],
                              x_buf.at[pl.ds(r, 1), pl.ds(d, d)], sem.at[1]).wait()
        return c
    lax.fori_loop(0, b, drain, 0, unroll=8)

    _mlp_tail(x_buf[...], w1_ref, b1_ref, w2_ref, b2_ref, w3_ref, b3_ref, out_ref)


# ---------------------------------------------------------------------------
# Wrapper
# ---------------------------------------------------------------------------
def _vmem_capacity_bytes() -> int:
    try:
        return int(pltpu.get_tpu_info().vmem_capacity_bytes)
    except Exception:
        return 64 * 1024 * 1024        # conservative (v7x: 64 MiB per TensorCore)


def net_forward(x_idx, params, *, b_tile=None, force_dma_gather=False):
    """x_idx: (B, 2) int [user_idx, item_idx].  Returns (B, 1) f32 in [1, 5]."""
    B = x_idx.shape[0]
    user_emb, item_emb = params["user_emb"], params["item_emb"]
    NU, D = user_emb.shape
    NI = item_emb.shape[0]

    # Clamp indices (OOB would be an unchecked OOB DMA on the fallback path).
    u_idx = jnp.clip(x_idx[:, 0].astype(jnp.int32), 0, NU - 1)
    i_idx = jnp.clip(x_idx[:, 1].astype(jnp.int32), 0, NI - 1)

    # Batch tile: multiple of 8 (sublane rule), and >= 2 tiles whenever B > 8
    # so both TensorCores are used on v7x via the "parallel" batch axis.
    if b_tile is None:
        b_tile = min(256, 8 * pl.cdiv(pl.cdiv(B, 2), 8))
    b_tile = max(8, 8 * pl.cdiv(int(b_tile), 8))

    # Fast path if the block-diagonal bf16 table comfortably fits in VMEM and
    # the one-hot width stays cheap; sizing is generation-aware (v7x = 64 MiB).
    comb_rows = NU + NI
    comb_bytes = comb_rows * (2 * D) * 2
    vmem_budget = min(_vmem_capacity_bytes() // 8, 8 * 1024 * 1024)
    use_fast = (not force_dma_gather) and comb_rows <= 4096 and comb_bytes <= vmem_budget

    if not use_fast:
        # Cap outstanding per-row DMAs (2 * b_tile) on the fallback path.
        b_tile = min(b_tile, 128)

    num_tiles = pl.cdiv(B, b_tile)
    B_pad = num_tiles * b_tile
    if B_pad != B:
        pad = B_pad - B
        u_idx = jnp.concatenate([u_idx, jnp.zeros((pad,), jnp.int32)])
        i_idx = jnp.concatenate([i_idx, jnp.zeros((pad,), jnp.int32)])

    cparams = pltpu.CompilerParams(dimension_semantics=("parallel",))
    out_shape = jax.ShapeDtypeStruct((B_pad, 1), jnp.float32)

    if use_fast:
        # Block-diagonal [user | item] table: gather + concat == one MXU matmul.
        # (Cheap to rebuild per call at these sizes; cache it if params are static.)
        comb = jnp.concatenate(
            [jnp.concatenate([user_emb, jnp.zeros((NU, D), user_emb.dtype)], axis=1),
             jnp.concatenate([jnp.zeros((NI, D), item_emb.dtype), item_emb], axis=1)],
            axis=0)                                                   # (NU+NI, 2D) bf16

        out = pl.pallas_call(
            functools.partial(_net_kernel_fast, NU),
            out_shape=out_shape,
            grid=(num_tiles,),
            in_specs=[
                pl.BlockSpec((b_tile, 1), lambda t: (t, 0)),          # user idx column
                pl.BlockSpec((b_tile, 1), lambda t: (t, 0)),          # item idx column
                pl.BlockSpec((comb_rows, 2 * D), lambda t: (0, 0)),   # block-diag table (resident)
                pl.BlockSpec((2 * D, 64), lambda t: (0, 0)),          # w1 (merged, K=2D)
                pl.BlockSpec((1, 64), lambda t: (0, 0)),              # b1
                pl.BlockSpec((64, 32), lambda t: (0, 0)),             # w2
                pl.BlockSpec((1, 32), lambda t: (0, 0)),              # b2
                pl.BlockSpec((1, 32), lambda t: (0, 0)),              # w3 row (VPU path)
                pl.BlockSpec((1, 1), lambda t: (0, 0)),               # b3
            ],
            out_specs=pl.BlockSpec((b_tile, 1), lambda t: (t, 0)),
            compiler_params=cparams,
        )(u_idx[:, None], i_idx[:, None], comb,
          params["w1"], params["b1"], params["w2"], params["b2"],
          params["w3"], params["b3"])
    else:
        grid_spec = pltpu.PrefetchScalarGridSpec(
            num_scalar_prefetch=2,                                    # u_idx, i_idx -> SMEM
            grid=(num_tiles,),
            in_specs=[
                pl.BlockSpec(memory_space=pl.ANY),                    # user table stays in HBM
                pl.BlockSpec(memory_space=pl.ANY),                    # item table stays in HBM
                pl.BlockSpec((2 * D, 64), lambda t, u, i: (0, 0)),    # w1 (merged)
                pl.BlockSpec((1, 64), lambda t, u, i: (0, 0)),        # b1
                pl.BlockSpec((64, 32), lambda t, u, i: (0, 0)),       # w2
                pl.BlockSpec((1, 32), lambda t, u, i: (0, 0)),        # b2
                pl.BlockSpec((1, 32), lambda t, u, i: (0, 0)),        # w3 row
                pl.BlockSpec((1, 1), lambda t, u, i: (0, 0)),         # b3
            ],
            out_specs=pl.BlockSpec((b_tile, 1), lambda t, u, i: (t, 0)),
            scratch_shapes=[
                pltpu.VMEM((b_tile, 2 * D), jnp.bfloat16),            # merged gather buffer
                pltpu.SemaphoreType.DMA((2,)),
            ],
        )
        out = pl.pallas_call(
            _net_kernel_dma,
            out_shape=out_shape,
            grid_spec=grid_spec,
            compiler_params=cparams,
        )(u_idx, i_idx, user_emb, item_emb,
          params["w1"], params["b1"], params["w2"], params["b2"],
          params["w3"], params["b3"])

    return out[:B]


# ---------------------------------------------------------------------------
# Params (PyTorch-equivalent init) and pure-JAX reference
# ---------------------------------------------------------------------------
def init_params(key, num_users, num_items, embedding_dim=128):
    ks = jax.random.split(key, 8)
    # nn.Embedding default init N(0,1); tables stored bf16 (MXU consumes bf16).
    user_emb = jax.random.normal(ks[0], (num_users, embedding_dim), jnp.float32)
    item_emb = jax.random.normal(ks[1], (num_items, embedding_dim), jnp.float32)

    def linear(kw, kb, fan_in, fan_out):
        # nn.Linear default init: U(-1/sqrt(fan_in), 1/sqrt(fan_in))
        bound = 1.0 / jnp.sqrt(jnp.float32(fan_in))
        w = jax.random.uniform(kw, (fan_in, fan_out), jnp.float32, -bound, bound)
        b = jax.random.uniform(kb, (1, fan_out), jnp.float32, -bound, bound)
        return w, b

    w1, b1 = linear(ks[2], ks[3], 2 * embedding_dim, 64)
    w2, b2 = linear(ks[4], ks[5], 64, 32)
    w3, b3 = linear(ks[6], ks[7], 32, 1)
    return dict(
        user_emb=user_emb.astype(jnp.bfloat16),
        item_emb=item_emb.astype(jnp.bfloat16),
        w1=w1.astype(jnp.bfloat16), b1=b1,          # merged (2D, 64)
        w2=w2.astype(jnp.bfloat16), b2=b2,
        w3=w3.T,                                     # (1, 32) f32 row (VPU final layer)
        b3=b3,                                       # (1, 1) f32
    )


def net_forward_ref(x_idx, params):
    """Pure-JAX reference (f32 math on the same bf16-stored weights/tables)."""
    D = params["user_emb"].shape[1]
    u = params["user_emb"][x_idx[:, 0]].astype(jnp.float32)
    i = params["item_emb"][x_idx[:, 1]].astype(jnp.float32)
    w1 = params["w1"].astype(jnp.float32)
    w2 = params["w2"].astype(jnp.float32)
    h1 = jax.nn.relu(u @ w1[:D] + i @ w1[D:] + params["b1"])
    h2 = jax.nn.relu(h1 @ w2 + params["b2"])
    logits = jnp.sum(h2 * params["w3"], axis=-1, keepdims=True) + params["b3"]
    return jax.nn.sigmoid(logits) * 4.0 + 1.0


if __name__ == "__main__":
    key = jax.random.PRNGKey(0)
    num_users, num_items, embedding_dim = 8, 16, 128
    B = 16

    params = init_params(key, num_users, num_items, embedding_dim)

    kidx_u, kidx_i = jax.random.split(jax.random.PRNGKey(0), 2)
    u_idx = jax.random.randint(kidx_u, (B,), 0, num_users, jnp.int32)
    i_idx = jax.random.randint(kidx_i, (B,), 0, num_items, jnp.int32)
    x = jnp.stack([u_idx, i_idx], axis=1)            # (B, 2) int32

    # Small tables -> VMEM-resident fast path; default b_tile=8 -> 2 parallel tiles.
    out = net_forward(x, params)
    out = jax.block_until_ready(out)

    ref = net_forward_ref(x, params)
    assert out.shape == (B, 1)
    # bf16 matmul operands / bf16 h1 => ~1e-2-level deviation from the f32 reference
    assert jnp.allclose(out, ref, atol=5e-2, rtol=5e-2), (
        float(jnp.max(jnp.abs(out - ref))))
    print("KERNEL_OK")
</pallas_src>

<mosaic_0001>
module attributes {stable_mosaic.version = 11 : i64} {
  func.func @_net_kernel_fast(%arg0: i32, %arg1: memref<8x1xi32, #tpu.memory_space<vmem>>, %arg2: memref<8x1xi32, #tpu.memory_space<vmem>>, %arg3: memref<24x256xbf16, #tpu.memory_space<vmem>>, %arg4: memref<256x64xbf16, #tpu.memory_space<vmem>>, %arg5: memref<1x64xf32, #tpu.memory_space<vmem>>, %arg6: memref<64x32xbf16, #tpu.memory_space<vmem>>, %arg7: memref<1x32xf32, #tpu.memory_space<vmem>>, %arg8: memref<1x32xf32, #tpu.memory_space<vmem>>, %arg9: memref<1x1xf32, #tpu.memory_space<vmem>>, %arg10: memref<8x1xf32, #tpu.memory_space<vmem>>) attributes {dimension_semantics = [#tpu.dimension_semantics<parallel>], iteration_bounds = array<i64: 2>, scalar_prefetch = 0 : i64, scratch_operands = 0 : i64, tpu.core_type = #tpu.core_type<tc>, window_params = [{transform_indices = @transform_0, window_bounds = array<i64: 8, 1>}, {transform_indices = @transform_1, window_bounds = array<i64: 8, 1>}, {pipeline_mode = #tpu.pipeline_mode<synchronous>, transform_indices = @transform_2, window_bounds = array<i64: 24, 256>}, {pipeline_mode = #tpu.pipeline_mode<synchronous>, transform_indices = @transform_3, window_bounds = array<i64: 256, 64>}, {pipeline_mode = #tpu.pipeline_mode<synchronous>, transform_indices = @transform_4, window_bounds = array<i64: 1, 64>}, {pipeline_mode = #tpu.pipeline_mode<synchronous>, transform_indices = @transform_5, window_bounds = array<i64: 64, 32>}, {pipeline_mode = #tpu.pipeline_mode<synchronous>, transform_indices = @transform_6, window_bounds = array<i64: 1, 32>}, {pipeline_mode = #tpu.pipeline_mode<synchronous>, transform_indices = @transform_7, window_bounds = array<i64: 1, 32>}, {pipeline_mode = #tpu.pipeline_mode<synchronous>, transform_indices = @transform_8, window_bounds = array<i64: 1, 1>}, {transform_indices = @transform_9, window_bounds = array<i64: 8, 1>}]} {
    %0 = tpu.iota {dimensions = array<i32: 1>} : vector<8x24xi32>
    %c0 = arith.constant 0 : index
    %c0_0 = arith.constant 0 : index
    %1 = vector.load %arg1[%c0, %c0_0] : memref<8x1xi32, #tpu.memory_space<vmem>>, vector<8x1xi32>
    %2 = vector.broadcast %1 : vector<8x1xi32> to vector<8x24xi32>
    %3 = arith.cmpi eq, %0, %2 : vector<8x24xi32>
    %c0_1 = arith.constant 0 : index
    %c0_2 = arith.constant 0 : index
    %4 = vector.load %arg2[%c0_1, %c0_2] : memref<8x1xi32, #tpu.memory_space<vmem>>, vector<8x1xi32>
    %c8_i32 = arith.constant 8 : i32
    %5 = vector.broadcast %c8_i32 : i32 to vector<8x1xi32>
    %6 = arith.addi %4, %5 : vector<8x1xi32>
    %7 = vector.broadcast %6 : vector<8x1xi32> to vector<8x24xi32>
    %8 = arith.cmpi eq, %0, %7 : vector<8x24xi32>
    %9 = arith.ori %3, %8 : vector<8x24xi1>
    %10 = arith.extui %9 : vector<8x24xi1> to vector<8x24xi32>
    %11 = arith.sitofp %10 : vector<8x24xi32> to vector<8x24xf32>
    %12 = arith.truncf %11 : vector<8x24xf32> to vector<8x24xbf16>
    %c0_3 = arith.constant 0 : index
    %c0_4 = arith.constant 0 : index
    %13 = vector.load %arg3[%c0_3, %c0_4] : memref<24x256xbf16, #tpu.memory_space<vmem>>, vector<24x256xbf16>
    %cst = arith.constant dense<0.000000e+00> : vector<8x256xf32>
    %14 = tpu.matmul %12, %13, %cst {dimension_numbers = #tpu.dot_dimension_numbers<[1], [0], [0], [1], [0, 0, 1, 1], [], []>} : vector<8x24xbf16>, vector<24x256xbf16>, vector<8x256xf32> -> vector<8x256xf32>
    %15 = arith.truncf %14 : vector<8x256xf32> to vector<8x256xbf16>
    %c0_5 = arith.constant 0 : index
    %c0_6 = arith.constant 0 : index
    %16 = vector.load %arg4[%c0_5, %c0_6] : memref<256x64xbf16, #tpu.memory_space<vmem>>, vector<256x64xbf16>
    %cst_7 = arith.constant dense<0.000000e+00> : vector<8x64xf32>
    %17 = tpu.matmul %15, %16, %cst_7 {dimension_numbers = #tpu.dot_dimension_numbers<[1], [0], [0], [1], [0, 0, 1, 1], [], []>} : vector<8x256xbf16>, vector<256x64xbf16>, vector<8x64xf32> -> vector<8x64xf32>
    %c0_8 = arith.constant 0 : index
    %c0_9 = arith.constant 0 : index
    %18 = vector.load %arg5[%c0_8, %c0_9] : memref<1x64xf32, #tpu.memory_space<vmem>>, vector<1x64xf32>
    %19 = vector.broadcast %18 : vector<1x64xf32> to vector<8x64xf32>
    %20 = arith.addf %17, %19 : vector<8x64xf32>
    %cst_10 = arith.constant 0.000000e+00 : f32
    %21 = vector.broadcast %cst_10 : f32 to vector<8x64xf32>
    %22 = arith.maximumf %20, %21 : vector<8x64xf32>
    %23 = arith.truncf %22 : vector<8x64xf32> to vector<8x64xbf16>
    %c0_11 = arith.constant 0 : index
    %c0_12 = arith.constant 0 : index
    %24 = vector.load %arg6[%c0_11, %c0_12] : memref<64x32xbf16, #tpu.memory_space<vmem>>, vector<64x32xbf16>
    %cst_13 = arith.constant dense<0.000000e+00> : vector<8x32xf32>
    %25 = tpu.matmul %23, %24, %cst_13 {dimension_numbers = #tpu.dot_dimension_numbers<[1], [0], [0], [1], [0, 0, 1, 1], [], []>} : vector<8x64xbf16>, vector<64x32xbf16>, vector<8x32xf32> -> vector<8x32xf32>
    %c0_14 = arith.constant 0 : index
    %c0_15 = arith.constant 0 : index
    %26 = vector.load %arg7[%c0_14, %c0_15] : memref<1x32xf32, #tpu.memory_space<vmem>>, vector<1x32xf32>
    %27 = vector.broadcast %26 : vector<1x32xf32> to vector<8x32xf32>
    %28 = arith.addf %25, %27 : vector<8x32xf32>
    %cst_16 = arith.constant 0.000000e+00 : f32
    %29 = vector.broadcast %cst_16 : f32 to vector<8x32xf32>
    %30 = arith.maximumf %28, %29 : vector<8x32xf32>
    %c0_17 = arith.constant 0 : index
    %c0_18 = arith.constant 0 : index
    %31 = vector.load %arg8[%c0_17, %c0_18] : memref<1x32xf32, #tpu.memory_space<vmem>>, vector<1x32xf32>
    %32 = vector.broadcast %31 : vector<1x32xf32> to vector<8x32xf32>
    %33 = arith.mulf %30, %32 : vector<8x32xf32>
    %cst_19 = arith.constant dense<0.000000e+00> : vector<8xf32>
    %34 = vector.multi_reduction <add>, %33, %cst_19 [1] : vector<8x32xf32> to vector<8xf32>
    %35 = vector.shape_cast %34 : vector<8xf32> to vector<8x1xf32>
    %c0_20 = arith.constant 0 : index
    %c0_21 = arith.constant 0 : index
    %36 = vector.load %arg9[%c0_20, %c0_21] : memref<1x1xf32, #tpu.memory_space<vmem>>, vector<1x1xf32>
    %37 = vector.broadcast %36 : vector<1x1xf32> to vector<8x1xf32>
    %38 = arith.addf %35, %37 : vector<8x1xf32>
    %39 = arith.negf %38 : vector<8x1xf32>
    %40 = math.exp %39 : vector<8x1xf32>
    %cst_22 = arith.constant 1.000000e+00 : f32
    %41 = vector.broadcast %cst_22 : f32 to vector<8x1xf32>
    %42 = arith.addf %41, %40 : vector<8x1xf32>
    %43 = arith.divf %41, %42 : vector<8x1xf32>
    %cst_23 = arith.constant 4.000000e+00 : f32
    %44 = vector.broadcast %cst_23 : f32 to vector<8x1xf32>
    %45 = arith.mulf %43, %44 : vector<8x1xf32>
    %cst_24 = arith.constant 1.000000e+00 : f32
    %46 = vector.broadcast %cst_24 : f32 to vector<8x1xf32>
    %47 = arith.addf %45, %46 : vector<8x1xf32>
    %c0_25 = arith.constant 0 : index
    %c0_26 = arith.constant 0 : index
    %48 = vector.load %arg10[%c0_25, %c0_26] : memref<8x1xf32, #tpu.memory_space<vmem>>, vector<8x1xf32>
    tpu.vector_store %arg10[%c0_25, %c0_26], %47 {strides = array<i32>} : memref<8x1xf32, #tpu.memory_space<vmem>>, vector<8x1xf32>,
    return
  }
  func.func @transform_0(%arg0: i32) -> (i32, i32) {
    %c0_i32 = arith.constant 0 : i32
    %c0_i32_0 = arith.constant 0 : i32
    return %arg0, %c0_i32 : i32, i32
  }
  func.func @transform_1(%arg0: i32) -> (i32, i32) {
    %c0_i32 = arith.constant 0 : i32
    %c0_i32_0 = arith.constant 0 : i32
    return %arg0, %c0_i32 : i32, i32
  }
  func.func @transform_2(%arg0: i32) -> (i32, i32) {
    %c0_i32 = arith.constant 0 : i32
    %c0_i32_0 = arith.constant 0 : i32
    %c0_i32_1 = arith.constant 0 : i32
    return %c0_i32, %c0_i32_0 : i32, i32
  }
  func.func @transform_3(%arg0: i32) -> (i32, i32) {
    %c0_i32 = arith.constant 0 : i32
    %c0_i32_0 = arith.constant 0 : i32
    %c0_i32_1 = arith.constant 0 : i32
    return %c0_i32, %c0_i32_0 : i32, i32
  }
  func.func @transform_4(%arg0: i32) -> (i32, i32) {
    %c0_i32 = arith.constant 0 : i32
    %c0_i32_0 = arith.constant 0 : i32
    %c0_i32_1 = arith.constant 0 : i32
    return %c0_i32, %c0_i32_0 : i32, i32
  }
  func.func @transform_5(%arg0: i32) -> (i32, i32) {
    %c0_i32 = arith.constant 0 : i32
    %c0_i32_0 = arith.constant 0 : i32
    %c0_i32_1 = arith.constant 0 : i32
    return %c0_i32, %c0_i32_0 : i32, i32
  }
  func.func @transform_6(%arg0: i32) -> (i32, i32) {
    %c0_i32 = arith.constant 0 : i32
    %c0_i32_0 = arith.constant 0 : i32
    %c0_i32_1 = arith.constant 0 : i32
    return %c0_i32, %c0_i32_0 : i32, i32
  }
  func.func @transform_7(%arg0: i32) -> (i32, i32) {
    %c0_i32 = arith.constant 0 : i32
    %c0_i32_0 = arith.constant 0 : i32
    %c0_i32_1 = arith.constant 0 : i32
    return %c0_i32, %c0_i32_0 : i32, i32
  }
  func.func @transform_8(%arg0: i32) -> (i32, i32) {
    %c0_i32 = arith.constant 0 : i32
    %c0_i32_0 = arith.constant 0 : i32
    %c0_i32_1 = arith.constant 0 : i32
    return %c0_i32, %c0_i32_0 : i32, i32
  }
  func.func @transform_9(%arg0: i32) -> (i32, i32) {
    %c0_i32 = arith.constant 0 : i32
    %c0_i32_0 = arith.constant 0 : i32
    return %arg0, %c0_i32 : i32, i32
  }
}

</mosaic_0001>

<llo_original>
// kernel: tpu_custom_call.1
$region0: #{tpu_custom_call.1}
  #allocation0 [shape = 'u32[]', space=smem, size = 0x4, offset = 0x4, fixed_abs, tag = 'smem constant byte address 0x4 - core index']
  #allocation1 [shape = 'u32[144,128]{1,0:T(1,128)}', space=vmem, size = 0x12000, scoped, tag = 'internal scratch']
  #allocation2 [shape = 'f32[1,1]{1,0:T(1,128)S(1)}', space=vmem, size = 0x200, scoped, tag = 'scoped memory for tpu_custom_call.1']
  %s0 = inlined_call_operand.vmem [shape: s32[16,1], index: 0, kind: input, shape index: {}]
  %s1 = inlined_call_operand.vmem [shape: s32[16,1], index: 1, kind: input, shape index: {}]
  %s2 = inlined_call_operand.vmem [shape: bf16[24,256], index: 2, kind: input, shape index: {}]
  %s3 = inlined_call_operand.vmem [shape: bf16[256,64], index: 3, kind: input, shape index: {}]
  %s4 = inlined_call_operand.vmem [shape: f32[1,64], index: 4, kind: input, shape index: {}]
  %s5 = inlined_call_operand.vmem [shape: bf16[64,32], index: 5, kind: input, shape index: {}]
  %s6 = inlined_call_operand.vmem [shape: f32[1,32], index: 6, kind: input, shape index: {}]
  %s7 = inlined_call_operand.vmem [shape: f32[1,32], index: 7, kind: input, shape index: {}]
  %s8 = inlined_call_operand.<no memory space> [shape: f32[1,1], index: 8, kind: input, shape index: {}]
  %s9 = inlined_call_operand.vmem [shape: f32[16,1], index: 9, kind: output, shape index: {}]
  %s10 = sld [smem:[#allocation0]]
  $region69: #{tpu_custom_call.1} parent=0
    _
  %s12 = ssub.s32 1, %s10
  %s13 = scalar_select 0, %s12, %s10
  %v14 = vstv %s8
  %15 = vst [vmem:[#allocation2] sm:$0x1] %v14
  loop: start=0, step=1, limit=4
  $region2: #{tpu_custom_call.1} parent=0 // loop_pre_header
    _
  $region3: #{tpu_custom_call.1} parent=0 // loop_header
    %s17 = sphi 0, %s21
    %p18 = scmp.ge.s32.totalorder %s17, 4
    %s27 = sphi 0, %s29
    %s30 = sphi 0, %s27
    %s31 = sphi 0, %s30
    %s47 = sphi 0, %s31
    %s53 = sphi 0, %s55
    %s56 = sphi 0, %s53
    %s57 = sphi 0, %s56
    %s73 = sphi 0, %s57
    %s77 = sphi 0, %s77
    %s79 = sphi 0, %s77
    %s80 = sphi 0, %s79
    %s94 = sphi 0, %s80
    %s98 = sphi 0, %s98
    %s100 = sphi 0, %s98
    %s101 = sphi 0, %s100
    %s115 = sphi 0, %s101
    %s119 = sphi 0, %s119
    %s121 = sphi 0, %s119
    %s122 = sphi 0, %s121
    %s136 = sphi 0, %s122
    %s140 = sphi 0, %s140
    %s142 = sphi 0, %s140
    %s143 = sphi 0, %s142
    %s157 = sphi 0, %s143
    %s161 = sphi 0, %s161
    %s163 = sphi 0, %s161
    %s164 = sphi 0, %s163
    %s178 = sphi 0, %s164
    %s182 = sphi 0, %s182
    %s184 = sphi 0, %s182
    %s185 = sphi 0, %s184
    %s199 = sphi 0, %s185
    %s203 = sphi 0, %s203
    %s205 = sphi 0, %s203
    %s206 = sphi 0, %s205
    %s220 = sphi 0, %s206
    %s226 = sphi 0, %s228
    %s229 = sphi 0, %s226
    %s230 = sphi 0, %s229
    %s246 = sphi 0, %s230
  $region4: #{tpu_custom_call.1} parent=0 // loop_header_branch
    %20 = sbr.rel (%p18) target = $region8
  $region5: #{tpu_custom_call.1} parent=0 // loop_body
    %s22 = ssub.s32 %s17, 1
    %s23 = ssub.s32 %s17, 2
    %s24 = sadd.s32 %s17, 1
    %s25 = ssub.s32 %s17, %s24
    %p26 = scmp.eq.s32.totalorder %s25, 0
    %s28 = sadd.s32 %s27, 1
    %s29 = scalar_select %p26, %s27, %s28
    %p32 = pneg %p26
    %p33 = scmp.eq.s32.totalorder %s17, 1
    %p34 = por %p32, %p33
    %p35 = scmp.ne.s32.totalorder %s27, %s30
    %p36 = scmp.eq.s32.totalorder %s17, 0
    %p37 = por %p35, %p36
    %p38 = scmp.ne.s32.totalorder %s27, %s30
    %p39 = scmp.eq.s32.totalorder %s22, 1
    %p40 = por %p38, %p39
    %p41 = scmp.ne.s32.totalorder %s30, %s31
    %p42 = scmp.eq.s32.totalorder %s22, 0
    %p43 = por %p41, %p42
    %p44 = scmp.ne.s32.totalorder %s30, %s31
    %p45 = scmp.eq.s32.totalorder %s23, 1
    %p46 = por %p44, %p45
    %p48 = scmp.ne.s32.totalorder %s31, %s47
    %p49 = scmp.eq.s32.totalorder %s23, 0
    %p50 = por %p48, %p49
    %s51 = ssub.s32 %s17, %s24
    %p52 = scmp.eq.s32.totalorder %s51, 0
    %s54 = sadd.s32 %s53, 1
    %s55 = scalar_select %p52, %s53, %s54
    %p58 = pneg %p52
    %p59 = scmp.eq.s32.totalorder %s17, 1
    %p60 = por %p58, %p59
    %p61 = scmp.ne.s32.totalorder %s53, %s56
    %p62 = scmp.eq.s32.totalorder %s17, 0
    %p63 = por %p61, %p62
    %p64 = scmp.ne.s32.totalorder %s53, %s56
    %p65 = scmp.eq.s32.totalorder %s22, 1
    %p66 = por %p64, %p65
    %p67 = scmp.ne.s32.totalorder %s56, %s57
    %p68 = scmp.eq.s32.totalorder %s22, 0
    %p69 = por %p67, %p68
    %p70 = scmp.ne.s32.totalorder %s56, %s57
    %p71 = scmp.eq.s32.totalorder %s23, 1
    %p72 = por %p70, %p71
    %p74 = scmp.ne.s32.totalorder %s57, %s73
    %p75 = scmp.eq.s32.totalorder %s23, 0
    %p76 = por %p74, %p75
    %s78 = sadd.s32 %s77, 1
    %p81 = scmp.eq.s32.totalorder %s17, 1
    %p82 = scmp.ne.s32.totalorder %s77, %s79
    %p83 = scmp.eq.s32.totalorder %s17, 0
    %p84 = por %p82, %p83
    %p85 = scmp.ne.s32.totalorder %s77, %s79
    %p86 = scmp.eq.s32.totalorder %s22, 1
    %p87 = por %p85, %p86
    %p88 = scmp.ne.s32.totalorder %s79, %s80
    %p89 = scmp.eq.s32.totalorder %s22, 0
    %p90 = por %p88, %p89
    %p91 = scmp.ne.s32.totalorder %s79, %s80
    %p92 = scmp.eq.s32.totalorder %s23, 1
    %p93 = por %p91, %p92
    %p95 = scmp.ne.s32.totalorder %s80, %s94
    %p96 = scmp.eq.s32.totalorder %s23, 0
    %p97 = por %p95, %p96
    %s99 = sadd.s32 %s98, 1
    %p102 = scmp.eq.s32.totalorder %s17, 1
    %p103 = scmp.ne.s32.totalorder %s98, %s100
    %p104 = scmp.eq.s32.totalorder %s17, 0
    %p105 = por %p103, %p104
    %p106 = scmp.ne.s32.totalorder %s98, %s100
    %p107 = scmp.eq.s32.totalorder %s22, 1
    %p108 = por %p106, %p107
    %p109 = scmp.ne.s32.totalorder %s100, %s101
    %p110 = scmp.eq.s32.totalorder %s22, 0
    %p111 = por %p109, %p110
    %p112 = scmp.ne.s32.totalorder %s100, %s101
    %p113 = scmp.eq.s32.totalorder %s23, 1
    %p114 = por %p112, %p113
    %p116 = scmp.ne.s32.totalorder %s101, %s115
    %p117 = scmp.eq.s32.totalorder %s23, 0
    %p118 = por %p116, %p117
    %s120 = sadd.s32 %s119, 1
    %p123 = scmp.eq.s32.totalorder %s17, 1
    %p124 = scmp.ne.s32.totalorder %s119, %s121
    %p125 = scmp.eq.s32.totalorder %s17, 0
    %p126 = por %p124, %p125
    %p127 = scmp.ne.s32.totalorder %s119, %s121
    %p128 = scmp.eq.s32.totalorder %s22, 1
    %p129 = por %p127, %p128
    %p130 = scmp.ne.s32.totalorder %s121, %s122
    %p131 = scmp.eq.s32.totalorder %s22, 0
    %p132 = por %p130, %p131
    %p133 = scmp.ne.s32.totalorder %s121, %s122
    %p134 = scmp.eq.s32.totalorder %s23, 1
    %p135 = por %p133, %p134
    %p137 = scmp.ne.s32.totalorder %s122, %s136
    %p138 = scmp.eq.s32.totalorder %s23, 0
    %p139 = por %p137, %p138
    %s141 = sadd.s32 %s140, 1
    %p144 = scmp.eq.s32.totalorder %s17, 1
    %p145 = scmp.ne.s32.totalorder %s140, %s142
    %p146 = scmp.eq.s32.totalorder %s17, 0
    %p147 = por %p145, %p146
    %p148 = scmp.ne.s32.totalorder %s140, %s142
    %p149 = scmp.eq.s32.totalorder %s22, 1
    %p150 = por %p148, %p149
    %p151 = scmp.ne.s32.totalorder %s142, %s143
    %p152 = scmp.eq.s32.totalorder %s22, 0
    %p153 = por %p151, %p152
    %p154 = scmp.ne.s32.totalorder %s142, %s143
    %p155 = scmp.eq.s32.totalorder %s23, 1
    %p156 = por %p154, %p155
    %p158 = scmp.ne.s32.totalorder %s143, %s157
    %p159 = scmp.eq.s32.totalorder %s23, 0
    %p160 = por %p158, %p159
    %s162 = sadd.s32 %s161, 1
    %p165 = scmp.eq.s32.totalorder %s17, 1
    %p166 = scmp.ne.s32.totalorder %s161, %s163
    %p167 = scmp.eq.s32.totalorder %s17, 0
    %p168 = por %p166, %p167
    %p169 = scmp.ne.s32.totalorder %s161, %s163
    %p170 = scmp.eq.s32.totalorder %s22, 1
    %p171 = por %p169, %p170
    %p172 = scmp.ne.s32.totalorder %s163, %s164
    %p173 = scmp.eq.s32.totalorder %s22, 0
    %p174 = por %p172, %p173
    %p175 = scmp.ne.s32.totalorder %s163, %s164
    %p176 = scmp.eq.s32.totalorder %s23, 1
    %p177 = por %p175, %p176
    %p179 = scmp.ne.s32.totalorder %s164, %s178
    %p180 = scmp.eq.s32.totalorder %s23, 0
    %p181 = por %p179, %p180
    %s183 = sadd.s32 %s182, 1
    %p186 = scmp.eq.s32.totalorder %s17, 1
    %p187 = scmp.ne.s32.totalorder %s182, %s184
    %p188 = scmp.eq.s32.totalorder %s17, 0
    %p189 = por %p187, %p188
    %p190 = scmp.ne.s32.totalorder %s182, %s184
    %p191 = scmp.eq.s32.totalorder %s22, 1
    %p192 = por %p190, %p191
    %p193 = scmp.ne.s32.totalorder %s184, %s185
    %p194 = scmp.eq.s32.totalorder %s22, 0
    %p195 = por %p193, %p194
    %p196 = scmp.ne.s32.totalorder %s184, %s185
    %p197 = scmp.eq.s32.totalorder %s23, 1
    %p198 = por %p196, %p197
    %p200 = scmp.ne.s32.totalorder %s185, %s199
    %p201 = scmp.eq.s32.totalorder %s23, 0
    %p202 = por %p200, %p201
    %s204 = sadd.s32 %s203, 1
    %p207 = scmp.eq.s32.totalorder %s17, 1
    %p208 = scmp.ne.s32.totalorder %s203, %s205
    %p209 = scmp.eq.s32.totalorder %s17, 0
    %p210 = por %p208, %p209
    %p211 = scmp.ne.s32.totalorder %s203, %s205
    %p212 = scmp.eq.s32.totalorder %s22, 1
    %p213 = por %p211, %p212
    %p214 = scmp.ne.s32.totalorder %s205, %s206
    %p215 = scmp.eq.s32.totalorder %s22, 0
    %p216 = por %p214, %p215
    %p217 = scmp.ne.s32.totalorder %s205, %s206
    %p218 = scmp.eq.s32.totalorder %s23, 1
    %p219 = por %p217, %p218
    %p221 = scmp.ne.s32.totalorder %s206, %s220
    %p222 = scmp.eq.s32.totalorder %s23, 0
    %p223 = por %p221, %p222
    %s224 = ssub.s32 %s17, %s24
    %p225 = scmp.eq.s32.totalorder %s224, 0
    %s227 = sadd.s32 %s226, 1
    %s228 = scalar_select %p225, %s226, %s227
    %p231 = pneg %p225
    %p232 = scmp.eq.s32.totalorder %s17, 1
    %p233 = por %p231, %p232
    %p234 = scmp.ne.s32.totalorder %s226, %s229
    %p235 = scmp.eq.s32.totalorder %s17, 0
    %p236 = por %p234, %p235
    %p237 = scmp.ne.s32.totalorder %s226, %s229
    %p238 = scmp.eq.s32.totalorder %s22, 1
    %p239 = por %p237, %p238
    %p240 = scmp.ne.s32.totalorder %s229, %s230
    %p241 = scmp.eq.s32.totalorder %s22, 0
    %p242 = por %p240, %p241
    %p243 = scmp.ne.s32.totalorder %s229, %s230
    %p244 = scmp.eq.s32.totalorder %s23, 1
    %p245 = por %p243, %p244
    %p247 = scmp.ne.s32.totalorder %s230, %s246
    %p248 = scmp.eq.s32.totalorder %s23, 0
    %p249 = por %p247, %p248
    %p250 = scmp.le.s32.totalorder 1, %s17
    %p251 = scmp.lt.s32.totalorder %s17, 3
    %p252 = pnand %p250, %p251
    %p253 = pneg %p252
    // Predicated region
    $region9: #{tpu_custom_call.1} parent=5 // pred_check
      _
    $region10: #{tpu_custom_call.1} parent=5 // pred_check_branch
      %255 = sbr.rel (%p252) target = $region12
    $region11: #{tpu_custom_call.1} parent=5 // pred_region
      %s256 = ssub.s32 %s17, 1
      // Predicated region
      $region13: #{tpu_custom_call.1} parent=11 // pred_check
        %p257 = pneg %p90
      $region14: #{tpu_custom_call.1} parent=11 // pred_check_branch
        %259 = sbr.rel (%p257) target = $region16
      $region15: #{tpu_custom_call.1} parent=11 // pred_region
        _
      $region16: #{tpu_custom_call.1} parent=11 // pred_fallthru
        _
      // Predicated region
      $region17: #{tpu_custom_call.1} parent=11 // pred_check
        %p260 = pneg %p111
      $region18: #{tpu_custom_call.1} parent=11 // pred_check_branch
        %262 = sbr.rel (%p260) target = $region20
      $region19: #{tpu_custom_call.1} parent=11 // pred_region
        _
      $region20: #{tpu_custom_call.1} parent=11 // pred_fallthru
        _
      // Predicated region
      $region21: #{tpu_custom_call.1} parent=11 // pred_check
        %p263 = pneg %p132
      $region22: #{tpu_custom_call.1} parent=11 // pred_check_branch
        %265 = sbr.rel (%p263) target = $region24
      $region23: #{tpu_custom_call.1} parent=11 // pred_region
        _
      $region24: #{tpu_custom_call.1} parent=11 // pred_fallthru
        _
      // Predicated region
      $region25: #{tpu_custom_call.1} parent=11 // pred_check
        %p266 = pneg %p153
      $region26: #{tpu_custom_call.1} parent=11 // pred_check_branch
        %268 = sbr.rel (%p266) target = $region28
      $region27: #{tpu_custom_call.1} parent=11 // pred_region
        _
      $region28: #{tpu_custom_call.1} parent=11 // pred_fallthru
        _
      // Predicated region
      $region29: #{tpu_custom_call.1} parent=11 // pred_check
        %p269 = pneg %p174
      $region30: #{tpu_custom_call.1} parent=11 // pred_check_branch
        %271 = sbr.rel (%p269) target = $region32
      $region31: #{tpu_custom_call.1} parent=11 // pred_region
        _
      $region32: #{tpu_custom_call.1} parent=11 // pred_fallthru
        _
      // Predicated region
      $region33: #{tpu_custom_call.1} parent=11 // pred_check
        %p272 = pneg %p195
      $region34: #{tpu_custom_call.1} parent=11 // pred_check_branch
        %274 = sbr.rel (%p272) target = $region36
      $region35: #{tpu_custom_call.1} parent=11 // pred_region
        _
      $region36: #{tpu_custom_call.1} parent=11 // pred_fallthru
        _
      // Predicated region
      $region37: #{tpu_custom_call.1} parent=11 // pred_check
        %p275 = pneg %p216
      $region38: #{tpu_custom_call.1} parent=11 // pred_check_branch
        %277 = sbr.rel (%p275) target = $region40
      $region39: #{tpu_custom_call.1} parent=11 // pred_region
        _
      $region40: #{tpu_custom_call.1} parent=11 // pred_fallthru
        _
    $region12: #{tpu_custom_call.1} parent=5 // pred_fallthru
      _
    %p278 = scmp.lt.s32.totalorder %s17, 2
    // Predicated region
    $region41: #{tpu_custom_call.1} parent=5 // pred_check
      %p279 = pneg %p278
    $region42: #{tpu_custom_call.1} parent=5 // pred_check_branch
      %281 = sbr.rel (%p279) target = $region44
    $region43: #{tpu_custom_call.1} parent=5 // pred_region
      // Predicated region
      $region45: #{tpu_custom_call.1} parent=43 // pred_check
        %p282 = pneg %p37
      $region46: #{tpu_custom_call.1} parent=43 // pred_check_branch
        %284 = sbr.rel (%p282) target = $region48
      $region47: #{tpu_custom_call.1} parent=43 // pred_region
        %p285 = scmp.lt.s32.totalorder %s17, 1
        %s286 = scalar_select %p285, %s17, 1
        %s287 = smul.addr %s286, 8
        %s288 = scalar_lea.vmem %s0, %s287
      $region48: #{tpu_custom_call.1} parent=43 // pred_fallthru
        _
      // Predicated region
      $region49: #{tpu_custom_call.1} parent=43 // pred_check
        %p289 = pneg %p63
      $region50: #{tpu_custom_call.1} parent=43 // pred_check_branch
        %291 = sbr.rel (%p289) target = $region52
      $region51: #{tpu_custom_call.1} parent=43 // pred_region
        %p292 = scmp.lt.s32.totalorder %s17, 1
        %s293 = scalar_select %p292, %s17, 1
        %s294 = smul.addr %s293, 8
        %s295 = scalar_lea.vmem %s1, %s294
      $region52: #{tpu_custom_call.1} parent=43 // pred_fallthru
        _
    $region44: #{tpu_custom_call.1} parent=5 // pred_fallthru
      _
    %p296 = scmp.le.s32.totalorder 1, %s17
    %p297 = scmp.lt.s32.totalorder %s17, 3
    %p298 = pnand %p296, %p297
    %p299 = pneg %p298
    // Predicated region
    $region53: #{tpu_custom_call.1} parent=5 // pred_check
      _
    $region54: #{tpu_custom_call.1} parent=5 // pred_check_branch
      %301 = sbr.rel (%p298) target = $region56
    $region55: #{tpu_custom_call.1} parent=5 // pred_region
      %s302 = ssub.s32 %s17, 1
      %p303 = scmp.lt.s32.totalorder %s22, 1
      %s304 = scalar_select %p303, %s22, 1
      %s305 = smul.addr %s304, 8
      %s306 = scalar_lea.vmem %s0, %s305
      %p307 = pneg %p43
      %p308 = pneg %p40
      %p309 = scmp.lt.s32.totalorder %s22, 1
      %s310 = scalar_select %p309, %s22, 1
      %s311 = smul.addr %s310, 8
      %s312 = scalar_lea.vmem %s1, %s311
      %p313 = pneg %p69
      %p314 = pneg %p66
      %p315 = pneg %p90
      %p316 = pneg %p87
      %p317 = pneg %p111
      %p318 = pneg %p108
      %p319 = pneg %p132
      %p320 = pneg %p129
      %p321 = pneg %p153
      %p322 = pneg %p150
      %p323 = pneg %p174
      %p324 = pneg %p171
      %p325 = pneg %p195
      %p326 = pneg %p192
      %p327 = pneg %p216
      %p328 = pneg %p213
      %p329 = pneg %p242
      %p330 = pneg %p239
      %p331 = scmp.lt.s32.totalorder %s22, 1
      %s332 = scalar_select %p331, %s22, 1
      %s333 = smul.addr %s332, 8
      %s334 = scalar_lea.vmem %s9, %s333
      %p335 = scmp.lt.s32.totalorder %s22, 1
      %s336 = scalar_select %p335, %s22, 1
      %s337 = smul.addr %s336, 8
      %s338 = scalar_lea.vmem %s0, %s337
      %p339 = scmp.lt.s32.totalorder %s22, 1
      %s340 = scalar_select %p339, %s22, 1
      %s341 = smul.addr %s340, 8
      %s342 = scalar_lea.vmem %s1, %s341
      %p343 = scmp.lt.s32.totalorder %s22, 1
      %s344 = scalar_select %p343, %s22, 1
      %s345 = smul.addr %s344, 8
      %s346 = scalar_lea.vmem %s9, %s345
      %v348 = vlaneseq
      %v349 = vand.u32 %v348, 127
      %v350 = vld [vmem:[%s338] sm:$0xff]
      %351 = vset.pattern.permute.xlu0 0
      %352 = vperm.xlu0 %351, %v350
      %v353 = vpop.permute.xlu0 %352
      %vm354 = vcmp.eq.s32.totalorder %v349, %v353
      %v355 = vld [vmem:[%s342] sm:$0xff]
      %v356 = vadd.s32 %v355, 8
      %357 = vset.pattern.permute.xlu0 0
      %358 = vperm.xlu0 %357, %v356
      %v359 = vpop.permute.xlu0 %358
      %vm360 = vcmp.eq.s32.totalorder %v349, %v359
      %vm361 = vmor %vm354, %vm360
      %v362 = vsel %vm361, 1, 0
      %v363 = vcvt.s32.f32 %v362
      %v364 = vpack.c.bf16 %v363, %v363
      %v365 = vld [vmem:[%s2] sm:$0xff]
      %v366 = vld [vmem:[%s2 + $0x8] sm:$0xff]
      %v367 = vld [vmem:[%s2 + $0x10] sm:$0xff]
      %v371 = vunpack.c.l.b16 %v365
      %v372 = vunpack.c.h.b16 %v365
      %v373 = vunpack.c.l.b16 %v366
      %v374 = vunpack.c.h.b16 %v366
      %v375 = vunpack.c.l.b16 %v367
      %v376 = vunpack.c.h.b16 %v367
      %v377 = vpack.c.b16 %v373, %v371
      %v378 = vpack.c.b16 %v374, %v372
      %v379 = vpack.c.b16 %v375, %v375
      %v380 = vpack.c.b16 %v376, %v376
      %vm383 = vcmask 195584
      %v385 = vsel %vm383, %v364, 0
      %vm387 = vcmask 1043456
      %v389 = vsel %vm387, %v379, 0
      %v392 = vsel %vm387, %v380, 0
      %394 = vmatprep.subr.bf16.mxu0 %v378
      %395 = vmatpush1.bf16.msra.mxu0 %v377
      %396 = vmatprep.subr.bf16.mxu0 %v392
      %397 = vmatpush1.bf16.msra.mxu0 %v389
      %398 = vmatprep.subr.bf16.mxu0 0
      %399 = vmatpush1.bf16.msra.mxu0 0
      %400 = vmatprep.subr.bf16.mxu0 0
      %401 = vmatpush1.bf16.msra.mxu0 0
      %402 = vmatprep.subr.bf16.mxu0 0
      %403 = vmatpush1.bf16.msra.mxu0 0
      %404 = vmatprep.subr.bf16.mxu0 0
      %405 = vmatpush1.bf16.msra.mxu0 0
      %406 = vmatprep.subr.bf16.mxu0 0
      %407 = vmatpush1.bf16.msra.mxu0 0
      %408 = vmatprep.subr.bf16.mxu0 0
      %409 = vmatpush1.bf16.msra.mxu0 0
      %410 = vmatprep.subr.bf16.mxu0 0
      %411 = vmatpush1.bf16.msra.mxu0 0
      %412 = vmatprep.subr.bf16.mxu0 0
      %413 = vmatpush1.bf16.msra.mxu0 0
      %414 = vmatprep.subr.bf16.mxu0 0
      %415 = vmatpush1.bf16.msra.mxu0 0
      %416 = vmatprep.subr.bf16.mxu0 0
      %417 = vmatpush1.bf16.msra.mxu0 0
      %418 = vmatprep.subr.bf16.mxu0 0
      %419 = vmatpush1.bf16.msra.mxu0 0
      %420 = vmatprep.subr.bf16.mxu0 0
      %421 = vmatpush1.bf16.msra.mxu0 0
      %422 = vmatprep.subr.bf16.mxu0 0
      %423 = vmatpush1.bf16.msra.mxu0 0
      %424 = vmatprep.subr.bf16.mxu0 0
      %425 = vmatpush1.bf16.msra.mxu0 0
      %426 = vmatprep.mubr.bf16.mxu0 0
      %427 = vmatmul.mubr.bf16.gmra.mrb[0].mxu0 %v385
      %v428 = vpop.f32.mrb[0].mxu0
      %v429 = vadd.f32 0.0, %v428
      %v430 = vpop.f32.mrb[0].mxu0
      %v431 = vadd.f32 0.0, %v430
      %v432 = vpop.f32.mrb[0].mxu0
      %v433 = vpop.f32.mrb[0].mxu0
      %434 = vdwg.mxu0
      %v435 = vpack.c.bf16 %v429, %v429
      %v436 = vpack.c.bf16 %v431, %v431
      %v437 = vld [vmem:[%s3] sm:$0xf]
      %v438 = vld [vmem:[%s3 + $0x4] sm:$0xf]
      %v439 = vld [vmem:[%s3 + $0x8] sm:$0xf]
      %v440 = vld [vmem:[%s3 + $0xc] sm:$0xf]
      %v441 = vld [vmem:[%s3 + $0x10] sm:$0xf]
      %v442 = vld [vmem:[%s3 + $0x14] sm:$0xf]
      %v443 = vld [vmem:[%s3 + $0x18] sm:$0xf]
      %v444 = vld [vmem:[%s3 + $0x1c] sm:$0xf]
      %v445 = vld [vmem:[%s3 + $0x20] sm:$0xf]
      %v446 = vld [vmem:[%s3 + $0x24] sm:$0xf]
      %v447 = vld [vmem:[%s3 + $0x28] sm:$0xf]
      %v448 = vld [vmem:[%s3 + $0x2c] sm:$0xf]
      %v449 = vld [vmem:[%s3 + $0x30] sm:$0xf]
      %v450 = vld [vmem:[%s3 + $0x34] sm:$0xf]
      %v451 = vld [vmem:[%s3 + $0x38] sm:$0xf]
      %v452 = vld [vmem:[%s3 + $0x3c] sm:$0xf]
      %v453 = vld [vmem:[%s3 + $0x40] sm:$0xf]
      %v454 = vld [vmem:[%s3 + $0x44] sm:$0xf]
      %v455 = vld [vmem:[%s3 + $0x48] sm:$0xf]
      %v456 = vld [vmem:[%s3 + $0x4c] sm:$0xf]
      %v457 = vld [vmem:[%s3 + $0x50] sm:$0xf]
      %v458 = vld [vmem:[%s3 + $0x54] sm:$0xf]
      %v459 = vld [vmem:[%s3 + $0x58] sm:$0xf]
      %v460 = vld [vmem:[%s3 + $0x5c] sm:$0xf]
      %v461 = vld [vmem:[%s3 + $0x60] sm:$0xf]
      %v462 = vld [vmem:[%s3 + $0x64] sm:$0xf]
      %v463 = vld [vmem:[%s3 + $0x68] sm:$0xf]
      %v464 = vld [vmem:[%s3 + $0x6c] sm:$0xf]
      %v465 = vld [vmem:[%s3 + $0x70] sm:$0xf]
      %v466 = vld [vmem:[%s3 + $0x74] sm:$0xf]
      %v467 = vld [vmem:[%s3 + $0x78] sm:$0xf]
      %v468 = vld [vmem:[%s3 + $0x7c] sm:$0xf]
      %v469 = vld [vmem:[%s4] sm:$0x1]
      %v471 = vlaneseq
      %v472 = vshrl.u32 %v471, 7
      %v473 = vsub.s32 0, %v472
      %v474 = vrot.slane %v469, %v473
      %v508 = vunpack.c.l.b16 %v437
      %v509 = vunpack.c.l.b16 %v438
      %v510 = vunpack.c.l.b16 %v439
      %v511 = vunpack.c.l.b16 %v440
      %v512 = vunpack.c.l.b16 %v441
      %v513 = vunpack.c.l.b16 %v442
      %v514 = vunpack.c.l.b16 %v443
      %v515 = vunpack.c.l.b16 %v444
      %v516 = vunpack.c.l.b16 %v445
      %v517 = vunpack.c.l.b16 %v446
      %v518 = vunpack.c.l.b16 %v447
      %v519 = vunpack.c.l.b16 %v448
      %v520 = vunpack.c.l.b16 %v449
      %v521 = vunpack.c.l.b16 %v450
      %v522 = vunpack.c.l.b16 %v451
      %v523 = vunpack.c.l.b16 %v452
      %v524 = vunpack.c.l.b16 %v453
      %v525 = vunpack.c.l.b16 %v454
      %v526 = vunpack.c.l.b16 %v455
      %v527 = vunpack.c.l.b16 %v456
      %v528 = vunpack.c.l.b16 %v457
      %v529 = vunpack.c.l.b16 %v458
      %v530 = vunpack.c.l.b16 %v459
      %v531 = vunpack.c.l.b16 %v460
      %v532 = vunpack.c.l.b16 %v461
      %v533 = vunpack.c.l.b16 %v462
      %v534 = vunpack.c.l.b16 %v463
      %v535 = vunpack.c.l.b16 %v464
      %v536 = vunpack.c.l.b16 %v465
      %v537 = vunpack.c.l.b16 %v466
      %v538 = vunpack.c.l.b16 %v467
      %v539 = vunpack.c.l.b16 %v468
      %v540 = vpack.c.b16 %v509, %v508
      %v541 = vpack.c.b16 %v511, %v510
      %v542 = vpack.c.b16 %v513, %v512
      %v543 = vpack.c.b16 %v515, %v514
      %v544 = vpack.c.b16 %v517, %v516
      %v545 = vpack.c.b16 %v519, %v518
      %v546 = vpack.c.b16 %v521, %v520
      %v547 = vpack.c.b16 %v523, %v522
      %v548 = vpack.c.b16 %v525, %v524
      %v549 = vpack.c.b16 %v527, %v526
      %v550 = vpack.c.b16 %v529, %v528
      %v551 = vpack.c.b16 %v531, %v530
      %v552 = vpack.c.b16 %v533, %v532
      %v553 = vpack.c.b16 %v535, %v534
      %v554 = vpack.c.b16 %v537, %v536
      %v555 = vpack.c.b16 %v539, %v538
      %572 = vmatprep.subr.bf16.mxu0 0
      %573 = vmatpush1.bf16.msra.mxu0 %v540
      %574 = vmatprep.subr.bf16.mxu0 0
      %575 = vmatpush1.bf16.msra.mxu0 %v541
      %576 = vmatprep.subr.bf16.mxu0 0
      %577 = vmatpush1.bf16.msra.mxu0 %v542
      %578 = vmatprep.subr.bf16.mxu0 0
      %579 = vmatpush1.bf16.msra.mxu0 %v543
      %580 = vmatprep.subr.bf16.mxu0 0
      %581 = vmatpush1.bf16.msra.mxu0 %v544
      %582 = vmatprep.subr.bf16.mxu0 0
      %583 = vmatpush1.bf16.msra.mxu0 %v545
      %584 = vmatprep.subr.bf16.mxu0 0
      %585 = vmatpush1.bf16.msra.mxu0 %v546
      %586 = vmatprep.subr.bf16.mxu0 0
      %587 = vmatpush1.bf16.msra.mxu0 %v547
      %588 = vmatprep.subr.bf16.mxu0 0
      %589 = vmatpush1.bf16.msra.mxu0 %v548
      %590 = vmatprep.subr.bf16.mxu0 0
      %591 = vmatpush1.bf16.msra.mxu0 %v549
      %592 = vmatprep.subr.bf16.mxu0 0
      %593 = vmatpush1.bf16.msra.mxu0 %v550
      %594 = vmatprep.subr.bf16.mxu0 0
      %595 = vmatpush1.bf16.msra.mxu0 %v551
      %596 = vmatprep.subr.bf16.mxu0 0
      %597 = vmatpush1.bf16.msra.mxu0 %v552
      %598 = vmatprep.subr.bf16.mxu0 0
      %599 = vmatpush1.bf16.msra.mxu0 %v553
      %600 = vmatprep.subr.bf16.mxu0 0
      %601 = vmatpush1.bf16.msra.mxu0 %v554
      %602 = vmatprep.subr.bf16.mxu0 0
      %603 = vmatpush1.bf16.msra.mxu0 %v555
      %604 = vmatprep.mubr.bf16.mxu0 %v436
      %605 = vmatmul.mubr.bf16.gmra.mrb[0].mxu0 %v435
      %v606 = vpop.f32.mrb[0].mxu0
      %v607 = vadd.f32 %v474, %v606
      %v608 = vpop.f32.mrb[0].mxu0
      %v609 = vpop.f32.mrb[0].mxu0
      %v610 = vpop.f32.mrb[0].mxu0
      %611 = vdwg.mxu0
      %v612 = vmax.f32 %v607, 0.0
      %v613 = vpack.c.bf16 %v612, %v612
      %v614 = vld [vmem:[%s5] sm:$0xf]
      %v615 = vld [vmem:[%s5 + $0x4] sm:$0xf]
      %v616 = vld [vmem:[%s5 + $0x8] sm:$0xf]
      %v617 = vld [vmem:[%s5 + $0xc] sm:$0xf]
      %v618 = vld [vmem:[%s5 + $0x10] sm:$0xf]
      %v619 = vld [vmem:[%s5 + $0x14] sm:$0xf]
      %v620 = vld [vmem:[%s5 + $0x18] sm:$0xf]
      %v621 = vld [vmem:[%s5 + $0x1c] sm:$0xf]
      %v622 = vld [vmem:[%s6] sm:$0x1]
      %v624 = vlaneseq
      %v625 = vshrl.u32 %v624, 7
      %v626 = vsub.s32 0, %v625
      %v627 = vrot.slane %v622, %v626
      %v637 = vunpack.c.l.b16 %v614
      %v638 = vunpack.c.l.b16 %v615
      %v639 = vunpack.c.l.b16 %v616
      %v640 = vunpack.c.l.b16 %v617
      %v641 = vunpack.c.l.b16 %v618
      %v642 = vunpack.c.l.b16 %v619
      %v643 = vunpack.c.l.b16 %v620
      %v644 = vunpack.c.l.b16 %v621
      %v645 = vpack.c.b16 %v638, %v637
      %v646 = vpack.c.b16 %v640, %v639
      %v647 = vpack.c.b16 %v642, %v641
      %v648 = vpack.c.b16 %v644, %v643
      %vm653 = vcmask 523264
      %v655 = vsel %vm653, %v613, 0
      %657 = vmatprep.subr.bf16.mxu0 0
      %658 = vmatpush1.bf16.msra.mxu0 %v645
      %659 = vmatprep.subr.bf16.mxu0 0
      %660 = vmatpush1.bf16.msra.mxu0 %v646
      %661 = vmatprep.subr.bf16.mxu0 0
      %662 = vmatpush1.bf16.msra.mxu0 %v647
      %663 = vmatprep.subr.bf16.mxu0 0
      %664 = vmatpush1.bf16.msra.mxu0 %v648
      %665 = vmatprep.subr.bf16.mxu0 0
      %666 = vmatpush1.bf16.msra.mxu0 0
      %667 = vmatprep.subr.bf16.mxu0 0
      %668 = vmatpush1.bf16.msra.mxu0 0
      %669 = vmatprep.subr.bf16.mxu0 0
      %670 = vmatpush1.bf16.msra.mxu0 0
      %671 = vmatprep.subr.bf16.mxu0 0
      %672 = vmatpush1.bf16.msra.mxu0 0
      %673 = vmatprep.subr.bf16.mxu0 0
      %674 = vmatpush1.bf16.msra.mxu0 0
      %675 = vmatprep.subr.bf16.mxu0 0
      %676 = vmatpush1.bf16.msra.mxu0 0
      %677 = vmatprep.subr.bf16.mxu0 0
      %678 = vmatpush1.bf16.msra.mxu0 0
      %679 = vmatprep.subr.bf16.mxu0 0
      %680 = vmatpush1.bf16.msra.mxu0 0
      %681 = vmatprep.subr.bf16.mxu0 0
      %682 = vmatpush1.bf16.msra.mxu0 0
      %683 = vmatprep.subr.bf16.mxu0 0
      %684 = vmatpush1.bf16.msra.mxu0 0
      %685 = vmatprep.subr.bf16.mxu0 0
      %686 = vmatpush1.bf16.msra.mxu0 0
      %687 = vmatprep.subr.bf16.mxu0 0
      %688 = vmatpush1.bf16.msra.mxu0 0
      %689 = vmatprep.mubr.bf16.mxu0 0
      %690 = vmatmul.mubr.bf16.gmra.mrb[0].mxu0 %v655
      %v691 = vpop.f32.mrb[0].mxu0
      %v692 = vadd.f32 %v627, %v691
      %v693 = vpop.f32.mrb[0].mxu0
      %v694 = vpop.f32.mrb[0].mxu0
      %v695 = vpop.f32.mrb[0].mxu0
      %696 = vdwg.mxu0
      %v697 = vmax.f32 %v692, 0.0
      %v698 = vld [vmem:[%s7] sm:$0x1]
      %v700 = vlaneseq
      %v701 = vshrl.u32 %v700, 7
      %v702 = vsub.s32 0, %v701
      %v703 = vrot.slane %v698, %v702
      %v705 = vmul.f32 %v697, %v703
      %vm706 = vcmask 261120
      %v707 = vsel %vm706, %v705, 0.0
      %708 = vadd.xlane.f32.xlu0 %v707
      %v709 = vpop.xlane.xlu0 %708
      %v710 = vld [vmem:[#allocation2] sm:$0x1]
      %v712 = vlaneseq
      %v713 = vshrl.u32 %v712, 7
      %v714 = vsub.s32 0, %v713
      %v715 = vrot.slane %v710, %v714
      %v717 = vadd.f32 %v709, %v715
      %v718 = vxor.u32 %v717, 2147483648
      %v719 = vmul.f32 %v718, 1.442695
      %v720 = vpow.pop %v719
      %v721 = vadd.f32 %v720, 1.0
      %v722 = vrcp.pop %v721
      %v723 = vmul.f32 1.0, %v722
      %v724 = vmul.f32 %v723, 4.0
      %v725 = vadd.f32 %v724, 1.0
      %vm726 = vcmask 7168
      %727 = vst.msk [vmem:[%s346] sm:$0xff] %vm726, %v725
      %p728 = scmp.lt.s32.totalorder %s22, 1
      %s729 = scalar_select %p728, %s22, 1
      %s730 = smul.addr %s729, 8
      %s731 = scalar_lea.vmem %s9, %s730
      // Predicated region
      $region57: #{tpu_custom_call.1} parent=55 // pred_check
        %p732 = pneg %p239
      $region58: #{tpu_custom_call.1} parent=55 // pred_check_branch
        %734 = sbr.rel (%p732) target = $region60
      $region59: #{tpu_custom_call.1} parent=55 // pred_region
        _
      $region60: #{tpu_custom_call.1} parent=55 // pred_fallthru
        _
    $region56: #{tpu_custom_call.1} parent=5 // pred_fallthru
      _
    %p735 = scmp.le.s32.totalorder 2, %s17
    // Predicated region
    $region61: #{tpu_custom_call.1} parent=5 // pred_check
      %p736 = pneg %p735
    $region62: #{tpu_custom_call.1} parent=5 // pred_check_branch
      %738 = sbr.rel (%p736) target = $region64
    $region63: #{tpu_custom_call.1} parent=5 // pred_region
      %s739 = ssub.s32 %s17, 2
      // Predicated region
      $region65: #{tpu_custom_call.1} parent=63 // pred_check
        %p740 = pneg %p245
      $region66: #{tpu_custom_call.1} parent=63 // pred_check_branch
        %742 = sbr.rel (%p740) target = $region68
      $region67: #{tpu_custom_call.1} parent=63 // pred_region
        %p743 = scmp.lt.s32.totalorder %s23, 1
        %s744 = scalar_select %p743, %s23, 1
        %s745 = smul.addr %s744, 8
        %s746 = scalar_lea.vmem %s9, %s745
      $region68: #{tpu_custom_call.1} parent=63 // pred_fallthru
        _
    $region64: #{tpu_custom_call.1} parent=5 // pred_fallthru
      _
  $region6: #{tpu_custom_call.1} parent=0 // loop_footer
    %s21 = sadd.s32 1, %s17
  $region7: #{tpu_custom_call.1} parent=0 // loop_footer_branch
    %16 = sbr.rel target = $region3
  $region8: #{tpu_custom_call.1} parent=0 // loop_exit
    _

</llo_original>
